<compile_context>
chip_gen: v7x
topology: tpu7x:2x2x1
jax: 0.10.0
libtpu: 0.0.40
codegen_flags: <defaults>
</compile_context>

<pallas_src>
import jax
import jax.numpy as jnp
from jax.experimental import pallas as pl
from jax.experimental.pallas import tpu as pltpu


# ---------------------------------------------------------------------------
# Kernel 1: channel attention weights (pool over L + Linear/ReLU/Linear/Sigmoid)
# ---------------------------------------------------------------------------
def _att_kernel(agg_ref, w1_ref, w2_ref, att_ref):
    agg = agg_ref[...].astype(jnp.float32)                        # (B, L, 512)
    pooled = jnp.mean(agg, axis=1)                                # (B, 512) == AdaptiveAvgPool2d(1)
    h = jnp.dot(pooled, w1_ref[...].astype(jnp.float32),
                preferred_element_type=jnp.float32)               # (B, 40)
    h = jnp.maximum(h, 0.0)                                       # ReLU
    logits = jnp.dot(h, w2_ref[...].astype(jnp.float32),
                     preferred_element_type=jnp.float32)          # (B, 40)
    att_ref[...] = 1.0 / (1.0 + jnp.exp(-logits))                 # Sigmoid


# ---------------------------------------------------------------------------
# Kernel 2: streamed channel-wise scale (pure VPU mul + lane-dense store)
# ---------------------------------------------------------------------------
def _scale_kernel(att_ref, ev_ref, out_ref):
    # att: (B, C, 1) broadcast along lanes against the (B, C, TILE_HW) tile.
    out_ref[...] = ev_ref[...] * att_ref[...]


def _pick_tile_hw(hw_pad128, max_tile=2048):
    """Largest multiple of 128 that is <= max_tile and divides hw_pad128."""
    best = 128
    t = 128
    while t <= max_tile:
        if hw_pad128 % t == 0:
            best = t
        t += 128
    return best


def channel_att(event_40C_feature, aggregrated_event, w1, w2):
    """event_40C_feature: (B, 40, H, W); aggregrated_event: tuple, [0] is (B, L, 512).
    w1: (512, 40), w2: (40, 40) -- torch Linear weights stored transposed (y = x @ w)."""
    agg = aggregrated_event[0]
    B, C, H, W = event_40C_feature.shape
    Bl, L, D = agg.shape
    assert B == Bl and D == 512 and C == 40

    # --- attention weights (B, 40), computed once --------------------------
    att = pl.pallas_call(
        _att_kernel,
        out_shape=jax.ShapeDtypeStruct((B, C), jnp.float32),
        in_specs=[
            pl.BlockSpec((B, L, D), lambda: (0, 0, 0)),
            pl.BlockSpec((D, C), lambda: (0, 0)),
            pl.BlockSpec((C, C), lambda: (0, 0)),
        ],
        out_specs=pl.BlockSpec((B, C), lambda: (0, 0)),
        cost_estimate=pl.CostEstimate(
            flops=int(2 * B * L * D + 2 * B * D * C + 2 * B * C * C),
            transcendentals=int(B * C),
            bytes_accessed=int((B * L * D + D * C + C * C + B * C) * 4),
        ),
    )(agg, w1, w2)

    # Scale in the event dtype (bf16 path stays bf16) and make att lane-broadcastable.
    att3 = att.astype(event_40C_feature.dtype).reshape(B, C, 1)

    # --- streamed channel-wise scale ----------------------------------------
    HW = H * W
    hw_pad128 = pl.cdiv(HW, 128) * 128         # lane-dense (unmasked vst) stores
    tile_hw = _pick_tile_hw(hw_pad128)
    n_tiles = hw_pad128 // tile_hw

    ev_flat = event_40C_feature.reshape(B, C, HW)
    if hw_pad128 != HW:
        ev_flat = jnp.pad(ev_flat, ((0, 0), (0, 0), (0, hw_pad128 - HW)))

    itemsize = jnp.dtype(event_40C_feature.dtype).itemsize
    tile_bytes = B * C * tile_hw * itemsize
    # in + out tiles, double-buffered, + resident att, with 2x headroom; keep
    # well under v7x's 64 MiB physical VMEM.
    vmem_limit = int(min(64 * 1024 * 1024, max(16 * 1024 * 1024, 8 * tile_bytes)))

    out = pl.pallas_call(
        _scale_kernel,
        out_shape=jax.ShapeDtypeStruct((B, C, hw_pad128), event_40C_feature.dtype),
        grid=(n_tiles,),
        in_specs=[
            pl.BlockSpec((B, C, 1), lambda i: (0, 0, 0)),          # att: DMA'd once
            pl.BlockSpec((B, C, tile_hw), lambda i: (0, 0, i)),    # event tile
        ],
        out_specs=pl.BlockSpec((B, C, tile_hw), lambda i: (0, 0, i)),
        compiler_params=pltpu.CompilerParams(
            dimension_semantics=("parallel",),   # shard tiles across TCs on v7x
            vmem_limit_bytes=vmem_limit,
        ),
        cost_estimate=pl.CostEstimate(
            flops=int(B * C * hw_pad128),
            transcendentals=0,
            bytes_accessed=int(2 * B * C * hw_pad128 * itemsize + B * C * itemsize),
        ),
    )(att3, ev_flat)

    if hw_pad128 != HW:
        out = out[:, :, :HW]
    return out.reshape(B, C, H, W)


if __name__ == "__main__":
    key = jax.random.PRNGKey(0)
    k1, k2, k3, k4 = jax.random.split(key, 4)

    B, C, H, W = 2, 40, 16, 16   # event_c must be 40 (fc output), hidden must be 512
    L, D = 8, 512

    event = jax.random.normal(k1, (B, C, H, W), dtype=jnp.float32)
    agg0 = jax.random.normal(k2, (B, L, D), dtype=jnp.float32)

    # Deterministic "Linear(…, bias=False)" weights, stored transposed: y = x @ w.
    w1 = jax.random.uniform(k3, (D, 40), dtype=jnp.float32, minval=-1.0, maxval=1.0) / jnp.sqrt(float(D))
    w2 = jax.random.uniform(k4, (40, 40), dtype=jnp.float32, minval=-1.0, maxval=1.0) / jnp.sqrt(40.0)

    out = channel_att(event, (agg0,), w1, w2)
    jax.block_until_ready(out)

    # Pure-JAX reference for sanity.
    pooled = jnp.mean(agg0, axis=1)
    att_ref = 1.0 / (1.0 + jnp.exp(-(jnp.maximum(pooled @ w1, 0.0) @ w2)))
    ref = event * att_ref[:, :, None, None]
    assert out.shape == (B, C, H, W)
    assert jnp.allclose(out, ref, atol=1e-5, rtol=1e-5)

    print("KERNEL_OK")
</pallas_src>

<mosaic_0001>
module attributes {stable_mosaic.version = 11 : i64} {
  func.func @_att_kernel(%arg0: memref<2x8x512xf32, #tpu.memory_space<vmem>>, %arg1: memref<512x40xf32, #tpu.memory_space<vmem>>, %arg2: memref<40x40xf32, #tpu.memory_space<vmem>>, %arg3: memref<2x40xf32, #tpu.memory_space<vmem>>) attributes {dimension_semantics = [], scalar_prefetch = 0 : i64, scratch_operands = 0 : i64, tpu.core_type = #tpu.core_type<tc>} {
    %c0 = arith.constant 0 : index
    %c0_0 = arith.constant 0 : index
    %c0_1 = arith.constant 0 : index
    %0 = vector.load %arg0[%c0, %c0_0, %c0_1] : memref<2x8x512xf32, #tpu.memory_space<vmem>>, vector<2x8x512xf32>
    %cst = arith.constant dense<0.000000e+00> : vector<2x512xf32>
    %1 = vector.multi_reduction <add>, %0, %cst [1] : vector<2x8x512xf32> to vector<2x512xf32>
    %cst_2 = arith.constant 8.000000e+00 : f32
    %2 = vector.broadcast %cst_2 : f32 to vector<2x512xf32>
    %3 = arith.divf %1, %2 : vector<2x512xf32>
    %c0_3 = arith.constant 0 : index
    %c0_4 = arith.constant 0 : index
    %4 = vector.load %arg1[%c0_3, %c0_4] : memref<512x40xf32, #tpu.memory_space<vmem>>, vector<512x40xf32>
    %cst_5 = arith.constant dense<0.000000e+00> : vector<2x40xf32>
    %5 = tpu.matmul %3, %4, %cst_5 {dimension_numbers = #tpu.dot_dimension_numbers<[1], [0], [0], [1], [0, 0, 1, 1], [], []>} : vector<2x512xf32>, vector<512x40xf32>, vector<2x40xf32> -> vector<2x40xf32>
    %cst_6 = arith.constant 0.000000e+00 : f32
    %6 = vector.broadcast %cst_6 : f32 to vector<2x40xf32>
    %7 = arith.maximumf %5, %6 : vector<2x40xf32>
    %c0_7 = arith.constant 0 : index
    %c0_8 = arith.constant 0 : index
    %8 = vector.load %arg2[%c0_7, %c0_8] : memref<40x40xf32, #tpu.memory_space<vmem>>, vector<40x40xf32>
    %cst_9 = arith.constant dense<0.000000e+00> : vector<2x40xf32>
    %9 = tpu.matmul %7, %8, %cst_9 {dimension_numbers = #tpu.dot_dimension_numbers<[1], [0], [0], [1], [0, 0, 1, 1], [], []>} : vector<2x40xf32>, vector<40x40xf32>, vector<2x40xf32> -> vector<2x40xf32>
    %cst_10 = arith.constant 0.000000e+00 : f32
    %10 = vector.broadcast %cst_10 : f32 to vector<2x40xf32>
    %11 = arith.subf %10, %9 : vector<2x40xf32>
    %12 = math.exp %11 : vector<2x40xf32>
    %cst_11 = arith.constant 1.000000e+00 : f32
    %13 = vector.broadcast %cst_11 : f32 to vector<2x40xf32>
    %14 = arith.addf %13, %12 : vector<2x40xf32>
    %cst_12 = arith.constant 1.000000e+00 : f32
    %15 = vector.broadcast %cst_12 : f32 to vector<2x40xf32>
    %16 = arith.divf %15, %14 : vector<2x40xf32>
    %c0_13 = arith.constant 0 : index
    %c0_14 = arith.constant 0 : index
    %17 = vector.load %arg3[%c0_13, %c0_14] : memref<2x40xf32, #tpu.memory_space<vmem>>, vector<2x40xf32>
    tpu.vector_store %arg3[%c0_13, %c0_14], %16 {strides = array<i32>} : memref<2x40xf32, #tpu.memory_space<vmem>>, vector<2x40xf32>,
    return
  }
}

</mosaic_0001>

<llo_original>
// kernel: tpu_custom_call.1
$region0: #{tpu_custom_call.1}
  #allocation0 [shape = 'u32[]', space=smem, size = 0x4, offset = 0x4, fixed_abs, tag = 'smem constant byte address 0x4 - core index']
  #allocation1 [shape = 'u32[144,128]{1,0:T(1,128)}', space=vmem, size = 0x12000, scoped, tag = 'internal scratch']
  %s0 = inlined_call_operand.vmem [shape: f32[2,8,512], index: 0, kind: input, shape index: {}]
  %s1 = inlined_call_operand.vmem [shape: f32[512,40], index: 1, kind: input, shape index: {}]
  %s2 = inlined_call_operand.vmem [shape: f32[40,40], index: 2, kind: input, shape index: {}]
  %s3 = inlined_call_operand.hbm [shape: f32[2,40], index: 3, kind: output, shape index: {}]
  %s4 = sld [smem:[#allocation0]]
  $region22: #{tpu_custom_call.1} parent=0
    _
  %s6 = ssub.s32 1, %s4
  %s7 = scalar_select 0, %s6, %s4
  $region1: #{tpu_custom_call.1} parent=0
    #allocation2 [shape = 'u8[1024]{0}', space=vmem, size = 0x400, scoped, tag = 'output window, operand 0, single buffered']
    #allocation3 [shape = 's32[1]{0}', space=sflag, size = 0x4, scoped, tag = 'scoped memory for tpu_custom_call.1']
    %8 = vsyncpa [#allocation3], 0
    // Predicated region
    $region2: #{tpu_custom_call.1} parent=1 // pred_check
      _
    $region3: #{tpu_custom_call.1} parent=1 // pred_check_branch
      %10 = sbr.rel (0) target = $region5
    $region4: #{tpu_custom_call.1} parent=1 // pred_region
      _
    $region5: #{tpu_custom_call.1} parent=1 // pred_fallthru
      _
    // Predicated region
    $region6: #{tpu_custom_call.1} parent=1 // pred_check
      _
    $region7: #{tpu_custom_call.1} parent=1 // pred_check_branch
      %12 = sbr.rel (0) target = $region9
    $region8: #{tpu_custom_call.1} parent=1 // pred_region
      _
    $region9: #{tpu_custom_call.1} parent=1 // pred_fallthru
      _
    // Predicated region
    $region10: #{tpu_custom_call.1} parent=1 // pred_check
      _
    $region11: #{tpu_custom_call.1} parent=1 // pred_check_branch
      %14 = sbr.rel (0) target = $region13
    $region12: #{tpu_custom_call.1} parent=1 // pred_region
      _
    $region13: #{tpu_custom_call.1} parent=1 // pred_fallthru
      _
    %v15 = vld [vmem:[%s0] sm:$0xff]
    %v16 = vld [vmem:[%s0 + $0x8] sm:$0xff]
    %v17 = vld [vmem:[%s0 + $0x10] sm:$0xff]
    %v18 = vld [vmem:[%s0 + $0x18] sm:$0xff]
    %v19 = vld [vmem:[%s0 + $0x20] sm:$0xff]
    %v20 = vld [vmem:[%s0 + $0x28] sm:$0xff]
    %v21 = vld [vmem:[%s0 + $0x30] sm:$0xff]
    %v22 = vld [vmem:[%s0 + $0x38] sm:$0xff]
    %v23 = vrot.slane %v15, 4
    %v24 = vadd.f32 %v15, %v23
    %v25 = vrot.slane %v24, 2
    %v26 = vadd.f32 %v24, %v25
    %v27 = vrot.slane %v26, 1
    %v28 = vadd.f32 %v26, %v27
    %v29 = vrot.slane %v16, 4
    %v30 = vadd.f32 %v16, %v29
    %v31 = vrot.slane %v30, 2
    %v32 = vadd.f32 %v30, %v31
    %v33 = vrot.slane %v32, 1
    %v34 = vadd.f32 %v32, %v33
    %v35 = vrot.slane %v17, 4
    %v36 = vadd.f32 %v17, %v35
    %v37 = vrot.slane %v36, 2
    %v38 = vadd.f32 %v36, %v37
    %v39 = vrot.slane %v38, 1
    %v40 = vadd.f32 %v38, %v39
    %v41 = vrot.slane %v18, 4
    %v42 = vadd.f32 %v18, %v41
    %v43 = vrot.slane %v42, 2
    %v44 = vadd.f32 %v42, %v43
    %v45 = vrot.slane %v44, 1
    %v46 = vadd.f32 %v44, %v45
    %v47 = vrot.slane %v19, 4
    %v48 = vadd.f32 %v19, %v47
    %v49 = vrot.slane %v48, 2
    %v50 = vadd.f32 %v48, %v49
    %v51 = vrot.slane %v50, 1
    %v52 = vadd.f32 %v50, %v51
    %v53 = vrot.slane %v20, 4
    %v54 = vadd.f32 %v20, %v53
    %v55 = vrot.slane %v54, 2
    %v56 = vadd.f32 %v54, %v55
    %v57 = vrot.slane %v56, 1
    %v58 = vadd.f32 %v56, %v57
    %v59 = vrot.slane %v21, 4
    %v60 = vadd.f32 %v21, %v59
    %v61 = vrot.slane %v60, 2
    %v62 = vadd.f32 %v60, %v61
    %v63 = vrot.slane %v62, 1
    %v64 = vadd.f32 %v62, %v63
    %v65 = vrot.slane %v22, 4
    %v66 = vadd.f32 %v22, %v65
    %v67 = vrot.slane %v66, 2
    %v68 = vadd.f32 %v66, %v67
    %v69 = vrot.slane %v68, 1
    %v70 = vadd.f32 %v68, %v69
    %v71 = vrcp.pop 8.0
    %v72 = vmul.f32 %v28, %v71
    %v73 = vmul.f32 %v34, %v71
    %v74 = vmul.f32 %v40, %v71
    %v75 = vmul.f32 %v46, %v71
    %v76 = vmul.f32 %v52, %v71
    %v77 = vmul.f32 %v58, %v71
    %v78 = vmul.f32 %v64, %v71
    %v79 = vmul.f32 %v70, %v71
    %v80 = vld [vmem:[%s1] sm:$0xff]
    %v81 = vld [vmem:[%s1 + $0x8] sm:$0xff]
    %v82 = vld [vmem:[%s1 + $0x10] sm:$0xff]
    %v83 = vld [vmem:[%s1 + $0x18] sm:$0xff]
    %v84 = vld [vmem:[%s1 + $0x20] sm:$0xff]
    %v85 = vld [vmem:[%s1 + $0x28] sm:$0xff]
    %v86 = vld [vmem:[%s1 + $0x30] sm:$0xff]
    %v87 = vld [vmem:[%s1 + $0x38] sm:$0xff]
    %v88 = vld [vmem:[%s1 + $0x40] sm:$0xff]
    %v89 = vld [vmem:[%s1 + $0x48] sm:$0xff]
    %v90 = vld [vmem:[%s1 + $0x50] sm:$0xff]
    %v91 = vld [vmem:[%s1 + $0x58] sm:$0xff]
    %v92 = vld [vmem:[%s1 + $0x60] sm:$0xff]
    %v93 = vld [vmem:[%s1 + $0x68] sm:$0xff]
    %v94 = vld [vmem:[%s1 + $0x70] sm:$0xff]
    %v95 = vld [vmem:[%s1 + $0x78] sm:$0xff]
    %v96 = vld [vmem:[%s1 + $0x80] sm:$0xff]
    %v97 = vld [vmem:[%s1 + $0x88] sm:$0xff]
    %v98 = vld [vmem:[%s1 + $0x90] sm:$0xff]
    %v99 = vld [vmem:[%s1 + $0x98] sm:$0xff]
    %v100 = vld [vmem:[%s1 + $0xa0] sm:$0xff]
    %v101 = vld [vmem:[%s1 + $0xa8] sm:$0xff]
    %v102 = vld [vmem:[%s1 + $0xb0] sm:$0xff]
    %v103 = vld [vmem:[%s1 + $0xb8] sm:$0xff]
    %v104 = vld [vmem:[%s1 + $0xc0] sm:$0xff]
    %v105 = vld [vmem:[%s1 + $0xc8] sm:$0xff]
    %v106 = vld [vmem:[%s1 + $0xd0] sm:$0xff]
    %v107 = vld [vmem:[%s1 + $0xd8] sm:$0xff]
    %v108 = vld [vmem:[%s1 + $0xe0] sm:$0xff]
    %v109 = vld [vmem:[%s1 + $0xe8] sm:$0xff]
    %v110 = vld [vmem:[%s1 + $0xf0] sm:$0xff]
    %v111 = vld [vmem:[%s1 + $0xf8] sm:$0xff]
    %v112 = vld [vmem:[%s1 + $0x100] sm:$0xff]
    %v113 = vld [vmem:[%s1 + $0x108] sm:$0xff]
    %v114 = vld [vmem:[%s1 + $0x110] sm:$0xff]
    %v115 = vld [vmem:[%s1 + $0x118] sm:$0xff]
    %v116 = vld [vmem:[%s1 + $0x120] sm:$0xff]
    %v117 = vld [vmem:[%s1 + $0x128] sm:$0xff]
    %v118 = vld [vmem:[%s1 + $0x130] sm:$0xff]
    %v119 = vld [vmem:[%s1 + $0x138] sm:$0xff]
    %v120 = vld [vmem:[%s1 + $0x140] sm:$0xff]
    %v121 = vld [vmem:[%s1 + $0x148] sm:$0xff]
    %v122 = vld [vmem:[%s1 + $0x150] sm:$0xff]
    %v123 = vld [vmem:[%s1 + $0x158] sm:$0xff]
    %v124 = vld [vmem:[%s1 + $0x160] sm:$0xff]
    %v125 = vld [vmem:[%s1 + $0x168] sm:$0xff]
    %v126 = vld [vmem:[%s1 + $0x170] sm:$0xff]
    %v127 = vld [vmem:[%s1 + $0x178] sm:$0xff]
    %v128 = vld [vmem:[%s1 + $0x180] sm:$0xff]
    %v129 = vld [vmem:[%s1 + $0x188] sm:$0xff]
    %v130 = vld [vmem:[%s1 + $0x190] sm:$0xff]
    %v131 = vld [vmem:[%s1 + $0x198] sm:$0xff]
    %v132 = vld [vmem:[%s1 + $0x1a0] sm:$0xff]
    %v133 = vld [vmem:[%s1 + $0x1a8] sm:$0xff]
    %v134 = vld [vmem:[%s1 + $0x1b0] sm:$0xff]
    %v135 = vld [vmem:[%s1 + $0x1b8] sm:$0xff]
    %v136 = vld [vmem:[%s1 + $0x1c0] sm:$0xff]
    %v137 = vld [vmem:[%s1 + $0x1c8] sm:$0xff]
    %v138 = vld [vmem:[%s1 + $0x1d0] sm:$0xff]
    %v139 = vld [vmem:[%s1 + $0x1d8] sm:$0xff]
    %v140 = vld [vmem:[%s1 + $0x1e0] sm:$0xff]
    %v141 = vld [vmem:[%s1 + $0x1e8] sm:$0xff]
    %v142 = vld [vmem:[%s1 + $0x1f0] sm:$0xff]
    %v143 = vld [vmem:[%s1 + $0x1f8] sm:$0xff]
    %vm152 = vcmask 1041409
    %v153 = vsel %vm152, %v76, %v72
    %v154 = vsel %vm152, %v77, %v73
    %v155 = vsel %vm152, %v78, %v74
    %v156 = vsel %vm152, %v79, %v75
    %161 = vmatprep.subr.mxu0 0.0
    %162 = vmatpush1.msra.mxu0 %v80
    %163 = vmatprep.subr.mxu0 0.0
    %164 = vmatpush1.msra.mxu0 %v81
    %165 = vmatprep.subr.mxu0 0.0
    %166 = vmatpush1.msra.mxu0 %v82
    %167 = vmatprep.subr.mxu0 0.0
    %168 = vmatpush1.msra.mxu0 %v83
    %169 = vmatprep.subr.mxu0 0.0
    %170 = vmatpush1.msra.mxu0 %v84
    %171 = vmatprep.subr.mxu0 0.0
    %172 = vmatpush1.msra.mxu0 %v85
    %173 = vmatprep.subr.mxu0 0.0
    %174 = vmatpush1.msra.mxu0 %v86
    %175 = vmatprep.subr.mxu0 0.0
    %176 = vmatpush1.msra.mxu0 %v87
    %177 = vmatprep.subr.mxu0 0.0
    %178 = vmatpush1.msra.mxu0 %v88
    %179 = vmatprep.subr.mxu0 0.0
    %180 = vmatpush1.msra.mxu0 %v89
    %181 = vmatprep.subr.mxu0 0.0
    %182 = vmatpush1.msra.mxu0 %v90
    %183 = vmatprep.subr.mxu0 0.0
    %184 = vmatpush1.msra.mxu0 %v91
    %185 = vmatprep.subr.mxu0 0.0
    %186 = vmatpush1.msra.mxu0 %v92
    %187 = vmatprep.subr.mxu0 0.0
    %188 = vmatpush1.msra.mxu0 %v93
    %189 = vmatprep.subr.mxu0 0.0
    %190 = vmatpush1.msra.mxu0 %v94
    %191 = vmatprep.subr.mxu0 0.0
    %192 = vmatpush1.msra.mxu0 %v95
    %193 = vmatprep.subr.mxu0 0.0
    %194 = vmatpush1.msra.mxu0 %v96
    %195 = vmatprep.subr.mxu0 0.0
    %196 = vmatpush1.msra.mxu0 %v97
    %197 = vmatprep.subr.mxu0 0.0
    %198 = vmatpush1.msra.mxu0 %v98
    %199 = vmatprep.subr.mxu0 0.0
    %200 = vmatpush1.msra.mxu0 %v99
    %201 = vmatprep.subr.mxu0 0.0
    %202 = vmatpush1.msra.mxu0 %v100
    %203 = vmatprep.subr.mxu0 0.0
    %204 = vmatpush1.msra.mxu0 %v101
    %205 = vmatprep.subr.mxu0 0.0
    %206 = vmatpush1.msra.mxu0 %v102
    %207 = vmatprep.subr.mxu0 0.0
    %208 = vmatpush1.msra.mxu0 %v103
    %209 = vmatprep.subr.mxu0 0.0
    %210 = vmatpush1.msra.mxu0 %v104
    %211 = vmatprep.subr.mxu0 0.0
    %212 = vmatpush1.msra.mxu0 %v105
    %213 = vmatprep.subr.mxu0 0.0
    %214 = vmatpush1.msra.mxu0 %v106
    %215 = vmatprep.subr.mxu0 0.0
    %216 = vmatpush1.msra.mxu0 %v107
    %217 = vmatprep.subr.mxu0 0.0
    %218 = vmatpush1.msra.mxu0 %v108
    %219 = vmatprep.subr.mxu0 0.0
    %220 = vmatpush1.msra.mxu0 %v109
    %221 = vmatprep.subr.mxu0 0.0
    %222 = vmatpush1.msra.mxu0 %v110
    %223 = vmatprep.subr.mxu0 0.0
    %224 = vmatpush1.msra.mxu0 %v111
    %225 = vmatprep.mubr.f32.mxu0 %v154
    %226 = vmatmul.mubr.f32.gmra.mrb[0].mxu0 %v153
    %v227 = vpop.f32.mrb[0].mxu0
    %v228 = vadd.f32 0.0, %v227
    %v229 = vpop.f32.mrb[0].mxu0
    %230 = vdwg.mxu0
    %231 = vmatprep.subr.mxu0 0.0
    %232 = vmatpush1.msra.mxu0 %v112
    %233 = vmatprep.subr.mxu0 0.0
    %234 = vmatpush1.msra.mxu0 %v113
    %235 = vmatprep.subr.mxu0 0.0
    %236 = vmatpush1.msra.mxu0 %v114
    %237 = vmatprep.subr.mxu0 0.0
    %238 = vmatpush1.msra.mxu0 %v115
    %239 = vmatprep.subr.mxu0 0.0
    %240 = vmatpush1.msra.mxu0 %v116
    %241 = vmatprep.subr.mxu0 0.0
    %242 = vmatpush1.msra.mxu0 %v117
    %243 = vmatprep.subr.mxu0 0.0
    %244 = vmatpush1.msra.mxu0 %v118
    %245 = vmatprep.subr.mxu0 0.0
    %246 = vmatpush1.msra.mxu0 %v119
    %247 = vmatprep.subr.mxu0 0.0
    %248 = vmatpush1.msra.mxu0 %v120
    %249 = vmatprep.subr.mxu0 0.0
    %250 = vmatpush1.msra.mxu0 %v121
    %251 = vmatprep.subr.mxu0 0.0
    %252 = vmatpush1.msra.mxu0 %v122
    %253 = vmatprep.subr.mxu0 0.0
    %254 = vmatpush1.msra.mxu0 %v123
    %255 = vmatprep.subr.mxu0 0.0
    %256 = vmatpush1.msra.mxu0 %v124
    %257 = vmatprep.subr.mxu0 0.0
    %258 = vmatpush1.msra.mxu0 %v125
    %259 = vmatprep.subr.mxu0 0.0
    %260 = vmatpush1.msra.mxu0 %v126
    %261 = vmatprep.subr.mxu0 0.0
    %262 = vmatpush1.msra.mxu0 %v127
    %263 = vmatprep.subr.mxu0 0.0
    %264 = vmatpush1.msra.mxu0 %v128
    %265 = vmatprep.subr.mxu0 0.0
    %266 = vmatpush1.msra.mxu0 %v129
    %267 = vmatprep.subr.mxu0 0.0
    %268 = vmatpush1.msra.mxu0 %v130
    %269 = vmatprep.subr.mxu0 0.0
    %270 = vmatpush1.msra.mxu0 %v131
    %271 = vmatprep.subr.mxu0 0.0
    %272 = vmatpush1.msra.mxu0 %v132
    %273 = vmatprep.subr.mxu0 0.0
    %274 = vmatpush1.msra.mxu0 %v133
    %275 = vmatprep.subr.mxu0 0.0
    %276 = vmatpush1.msra.mxu0 %v134
    %277 = vmatprep.subr.mxu0 0.0
    %278 = vmatpush1.msra.mxu0 %v135
    %279 = vmatprep.subr.mxu0 0.0
    %280 = vmatpush1.msra.mxu0 %v136
    %281 = vmatprep.subr.mxu0 0.0
    %282 = vmatpush1.msra.mxu0 %v137
    %283 = vmatprep.subr.mxu0 0.0
    %284 = vmatpush1.msra.mxu0 %v138
    %285 = vmatprep.subr.mxu0 0.0
    %286 = vmatpush1.msra.mxu0 %v139
    %287 = vmatprep.subr.mxu0 0.0
    %288 = vmatpush1.msra.mxu0 %v140
    %289 = vmatprep.subr.mxu0 0.0
    %290 = vmatpush1.msra.mxu0 %v141
    %291 = vmatprep.subr.mxu0 0.0
    %292 = vmatpush1.msra.mxu0 %v142
    %293 = vmatprep.subr.mxu0 0.0
    %294 = vmatpush1.msra.mxu0 %v143
    %295 = vmatprep.mubr.f32.mxu0 %v156
    %296 = vmatmul.mubr.f32.gmra.mrb[0].mxu0 %v155
    %v297 = vpop.f32.mrb[0].mxu0
    %v298 = vadd.f32 %v228, %v297
    %v299 = vpop.f32.mrb[0].mxu0
    %300 = vdwg.mxu0
    %v301 = vmax.f32 %v298, 0.0
    %v302 = vld [vmem:[%s2] sm:$0xff]
    %v303 = vld [vmem:[%s2 + $0x8] sm:$0xff]
    %v304 = vld [vmem:[%s2 + $0x10] sm:$0xff]
    %v305 = vld [vmem:[%s2 + $0x18] sm:$0xff]
    %v306 = vld [vmem:[%s2 + $0x20] sm:$0xff]
    %vm307 = vcmask 326656
    %v309 = vsel %vm307, %v301, 0
    %311 = vmatprep.subr.mxu0 0.0
    %312 = vmatpush1.msra.mxu0 %v302
    %313 = vmatprep.subr.mxu0 0.0
    %314 = vmatpush1.msra.mxu0 %v303
    %315 = vmatprep.subr.mxu0 0.0
    %316 = vmatpush1.msra.mxu0 %v304
    %317 = vmatprep.subr.mxu0 0.0
    %318 = vmatpush1.msra.mxu0 %v305
    %319 = vmatprep.subr.mxu0 0.0
    %320 = vmatpush1.msra.mxu0 %v306
    %321 = vmatprep.subr.mxu0 0.0
    %322 = vmatpush1.msra.mxu0 0.0
    %323 = vmatprep.subr.mxu0 0.0
    %324 = vmatpush1.msra.mxu0 0.0
    %325 = vmatprep.subr.mxu0 0.0
    %326 = vmatpush1.msra.mxu0 0.0
    %327 = vmatprep.subr.mxu0 0.0
    %328 = vmatpush1.msra.mxu0 0.0
    %329 = vmatprep.subr.mxu0 0.0
    %330 = vmatpush1.msra.mxu0 0.0
    %331 = vmatprep.subr.mxu0 0.0
    %332 = vmatpush1.msra.mxu0 0.0
    %333 = vmatprep.subr.mxu0 0.0
    %334 = vmatpush1.msra.mxu0 0.0
    %335 = vmatprep.subr.mxu0 0.0
    %336 = vmatpush1.msra.mxu0 0.0
    %337 = vmatprep.subr.mxu0 0.0
    %338 = vmatpush1.msra.mxu0 0.0
    %339 = vmatprep.subr.mxu0 0.0
    %340 = vmatpush1.msra.mxu0 0.0
    %341 = vmatprep.subr.mxu0 0.0
    %342 = vmatpush1.msra.mxu0 0.0
    %343 = vmatprep.subr.mxu0 0.0
    %344 = vmatpush1.msra.mxu0 0.0
    %345 = vmatprep.subr.mxu0 0.0
    %346 = vmatpush1.msra.mxu0 0.0
    %347 = vmatprep.subr.mxu0 0.0
    %348 = vmatpush1.msra.mxu0 0.0
    %349 = vmatprep.subr.mxu0 0.0
    %350 = vmatpush1.msra.mxu0 0.0
    %351 = vmatprep.subr.mxu0 0.0
    %352 = vmatpush1.msra.mxu0 0.0
    %353 = vmatprep.subr.mxu0 0.0
    %354 = vmatpush1.msra.mxu0 0.0
    %355 = vmatprep.subr.mxu0 0.0
    %356 = vmatpush1.msra.mxu0 0.0
    %357 = vmatprep.subr.mxu0 0.0
    %358 = vmatpush1.msra.mxu0 0.0
    %359 = vmatprep.subr.mxu0 0.0
    %360 = vmatpush1.msra.mxu0 0.0
    %361 = vmatprep.subr.mxu0 0.0
    %362 = vmatpush1.msra.mxu0 0.0
    %363 = vmatprep.subr.mxu0 0.0
    %364 = vmatpush1.msra.mxu0 0.0
    %365 = vmatprep.subr.mxu0 0.0
    %366 = vmatpush1.msra.mxu0 0.0
    %367 = vmatprep.subr.mxu0 0.0
    %368 = vmatpush1.msra.mxu0 0.0
    %369 = vmatprep.subr.mxu0 0.0
    %370 = vmatpush1.msra.mxu0 0.0
    %371 = vmatprep.subr.mxu0 0.0
    %372 = vmatpush1.msra.mxu0 0.0
    %373 = vmatprep.subr.mxu0 0.0
    %374 = vmatpush1.msra.mxu0 0.0
    %375 = vmatprep.mubr.f32.mxu0 0.0
    %376 = vmatmul.mubr.f32.gmra.mrb[0].mxu0 %v309
    %v377 = vpop.f32.mrb[0].mxu0
    %v378 = vadd.f32 0.0, %v377
    %v379 = vpop.f32.mrb[0].mxu0
    %380 = vdwg.mxu0
    %v381 = vsub.f32 0.0, %v378
    %v382 = vmul.f32 %v381, 1.442695
    %v383 = vpow.pop %v382
    %v384 = vadd.f32 %v383, 1.0
    %v385 = vrcp.pop %v384
    %v386 = vmul.f32 1.0, %v385
    %vm387 = vcmask 320512
    %388 = vst.msk [vmem:[#allocation2] sm:$0x3] %vm387, %v386
    // Predicated region
    $region14: #{tpu_custom_call.1} parent=1 // pred_check
      _
    $region15: #{tpu_custom_call.1} parent=1 // pred_check_branch
      %390 = sbr.rel (0) target = $region17
    $region16: #{tpu_custom_call.1} parent=1 // pred_region
      %s392 = ssub.s32 32, 32
      %393 = vsyncadd [#allocation3], %s392
      %s395 = sshll.u32 [#allocation2], 4
      %s396 = int_to_ptr.vmem [resolvable:$true] %s395
      %398 = dma.vmem_to_hbm [thread:$0]  %s396, 32, %s3, [#allocation3]
    $region17: #{tpu_custom_call.1} parent=1 // pred_fallthru
      _
    // Predicated region
    $region18: #{tpu_custom_call.1} parent=1 // pred_check
      _
    $region19: #{tpu_custom_call.1} parent=1 // pred_check_branch
      %400 = sbr.rel (0) target = $region21
    $region20: #{tpu_custom_call.1} parent=1 // pred_region
      %401 = dma.done [#allocation3], 32
    $region21: #{tpu_custom_call.1} parent=1 // pred_fallthru
      _
    %402 = vsyncpa [#allocation3], 1

</llo_original>
